<compile_context>
chip_gen: v6e
topology: v6e:2x2x1
jax: 0.10.0
libtpu: 0.0.40
codegen_flags: <defaults>
</compile_context>

<pallas_src>
import functools

import jax
import jax.numpy as jnp
from jax.experimental import pallas as pl
from jax.experimental.pallas import tpu as pltpu

_LANE = 128  # vreg lane width


def _device_kind() -> str:
    try:
        return jax.devices()[0].device_kind.lower()
    except Exception:
        return ""


def _target_block_bytes(kind: str) -> int:
    """Per-buffer block target, sized so 2 buffers x 2 (double-buffer) x block
    always fits the *default* scoped-VMEM limit of the generation."""
    if "v5" in kind:
        return 2 << 20   # v5e: 2 MiB -> ~2.5 us DMA/step >> 0.35 us step tax; 8 MiB total < 16 MiB scoped
    return 4 << 20       # v6e / v7x (and unknown): 16 MiB total < 32 MiB scoped; amortizes step tax <10%


def _min_sublane(dtype) -> int:
    """Minimum packed sublane tile for this dtype (8/16/32 for 32/16/8-bit)."""
    bits = jnp.dtype(dtype).itemsize * 8
    return max(8, 256 // bits)


def _pick_width(n: int) -> int:
    """Widest lane-dense slab width (multiple of 128) that divides n."""
    for w in (4096, 2048, 1024, 512, 256, 128):
        if n % w == 0:
            return w
    return 0


def _pick_block_rows(rows: int, width: int, itemsize: int, sub_min: int,
                     target_bytes: int, prefer_even_grid: bool) -> int:
    target_rows = target_bytes // (width * itemsize)
    target_rows = max(sub_min, (target_rows // sub_min) * sub_min)
    if rows <= target_rows:
        return rows  # single full-extent block (always a legal block shape)

    # Prefer block_rows (multiples of the dtype's packed sublane tile) that
    # divide rows exactly -> no masked partial last block. On 2-TC parts (v7x)
    # also prefer an even grid so both TensorCores get equal work.
    fallback = None
    br = target_rows
    while br >= sub_min:
        if rows % br == 0:
            grid_steps = rows // br
            if (not prefer_even_grid) or (grid_steps % 2 == 0):
                return br
            if fallback is None:
                fallback = br
        br -= sub_min
    if fallback is not None:
        return fallback
    return target_rows  # last resort: padded final block (masked stores, still correct)


def _copy_kernel(x_ref, o_ref):
    # Identity copy of the current lane-dense block.
    o_ref[...] = x_ref[...]


@functools.partial(jax.jit, static_argnames=("donate_input",))
def squeeze_pallas(x: jax.Array, *, donate_input: bool = False) -> jax.Array:
    """Equivalent of torch.Tensor.squeeze(): drops every size-1 dimension."""
    squeezed_shape = tuple(d for d in x.shape if d != 1)
    n = x.size

    if donate_input:
        # squeeze() is a pure metadata reshape: when the caller hands the buffer
        # over there is nothing to copy, so skip the Pallas pass entirely and
        # save the full 2*N-byte HBM round-trip.
        return jnp.reshape(x, squeezed_shape)

    width = _pick_width(n)
    if width == 0:
        # Empty / tiny / ragged element counts: metadata-only reshape is optimal.
        return jnp.reshape(x, squeezed_shape)

    rows = n // width
    # Row-major flatten of a contiguous array: metadata-only, no extra HBM pass.
    flat2d = jnp.reshape(x, (rows, width))

    kind = _device_kind()
    itemsize = jnp.dtype(x.dtype).itemsize
    block_rows = _pick_block_rows(
        rows, width, itemsize,
        sub_min=_min_sublane(x.dtype),
        target_bytes=_target_block_bytes(kind),
        prefer_even_grid=("v7" in kind),
    )
    grid = (pl.cdiv(rows, block_rows),)

    out2d = pl.pallas_call(
        _copy_kernel,
        out_shape=jax.ShapeDtypeStruct((rows, width), x.dtype),
        grid=grid,
        in_specs=[pl.BlockSpec((block_rows, width), lambda i: (i, 0))],
        out_specs=pl.BlockSpec((block_rows, width), lambda i: (i, 0)),
        compiler_params=pltpu.CompilerParams(
            dimension_semantics=("parallel",),  # lets v7x shard the grid over its 2 TCs
        ),
        # Pure bandwidth op: 0 flops, read N + write N bytes.
        cost_estimate=pl.CostEstimate(
            flops=0, transcendentals=0, bytes_accessed=2 * n * itemsize),
    )(flat2d)

    # The squeeze itself: metadata reshape of the copied slab.
    return jnp.reshape(out2d, squeezed_shape)


if __name__ == "__main__":
    key = jax.random.PRNGKey(0)
    k1, k2, k3 = jax.random.split(key, 3)

    # 1) NCHW-style f32 input with a size-1 channel dim (matches the module's use).
    x1 = jax.random.normal(k1, (2, 1, 16, 16), dtype=jnp.float32)
    o1 = jax.block_until_ready(squeeze_pallas(x1))
    r1 = jnp.squeeze(x1)
    assert o1.shape == r1.shape == (2, 16, 16), (o1.shape, r1.shape)
    assert o1.dtype == x1.dtype
    assert jnp.array_equal(o1, r1)

    # 1b) Donated path: metadata-only reshape, no Pallas copy.
    o1d = jax.block_until_ready(squeeze_pallas(x1, donate_input=True))
    assert o1d.shape == (2, 16, 16) and jnp.array_equal(o1d, r1)

    # 2) Larger f32 input exercising the wide-slab copy path.
    x2 = jax.random.normal(k2, (2, 1, 512, 512), dtype=jnp.float32)
    o2 = jax.block_until_ready(squeeze_pallas(x2))
    r2 = jnp.squeeze(x2)
    assert o2.shape == r2.shape == (2, 512, 512)
    assert jnp.array_equal(o2, r2)

    # 3) bf16 input (dtype-dependent sublane packing).
    x3 = jax.random.normal(k3, (2, 1, 8, 1024), dtype=jnp.bfloat16)
    o3 = jax.block_until_ready(squeeze_pallas(x3))
    r3 = jnp.squeeze(x3)
    assert o3.shape == r3.shape == (2, 8, 1024)
    assert o3.dtype == jnp.bfloat16
    assert jnp.array_equal(o3, r3)

    # 4) Degenerate / ragged sizes fall back to the metadata-only reshape.
    x4 = jnp.arange(5, dtype=jnp.float32).reshape(1, 5, 1)
    o4 = jax.block_until_ready(squeeze_pallas(x4))
    assert o4.shape == (5,)
    assert jnp.array_equal(o4, jnp.squeeze(x4))

    print("KERNEL_OK")
</pallas_src>

<mosaic_0001>
module attributes {stable_mosaic.version = 11 : i64} {
  func.func @_copy_kernel(%arg0: i32, %arg1: memref<1x512xf32, #tpu.memory_space<vmem>>, %arg2: memref<1x512xf32, #tpu.memory_space<vmem>>) attributes {dimension_semantics = [#tpu.dimension_semantics<parallel>], iteration_bounds = array<i64: 1>, scalar_prefetch = 0 : i64, scratch_operands = 0 : i64, tpu.core_type = #tpu.core_type<tc>, window_params = [{transform_indices = @transform_0, window_bounds = array<i64: 1, 512>}, {transform_indices = @transform_1, window_bounds = array<i64: 1, 512>}]} {
    %c0 = arith.constant 0 : index
    %c0_0 = arith.constant 0 : index
    %0 = vector.load %arg1[%c0, %c0_0] : memref<1x512xf32, #tpu.memory_space<vmem>>, vector<1x512xf32>
    %c0_1 = arith.constant 0 : index
    %c0_2 = arith.constant 0 : index
    %1 = vector.load %arg2[%c0_1, %c0_2] : memref<1x512xf32, #tpu.memory_space<vmem>>, vector<1x512xf32>
    tpu.vector_store %arg2[%c0_1, %c0_2], %0 {strides = array<i32>} : memref<1x512xf32, #tpu.memory_space<vmem>>, vector<1x512xf32>,
    return
  }
  func.func @transform_0(%arg0: i32) -> (i32, i32) {
    %c0_i32 = arith.constant 0 : i32
    %c0_i32_0 = arith.constant 0 : i32
    return %arg0, %c0_i32 : i32, i32
  }
  func.func @transform_1(%arg0: i32) -> (i32, i32) {
    %c0_i32 = arith.constant 0 : i32
    %c0_i32_0 = arith.constant 0 : i32
    return %arg0, %c0_i32 : i32, i32
  }
}

</mosaic_0001>

<llo_original>
// kernel: squeeze_pallas.1
$region0: #{squeeze_pallas.1}
  #allocation0 [shape = 'u32[]', space=smem, size = 0x4, offset = 0x4, fixed_abs, tag = 'smem constant byte address 0x4 - core index']
  #allocation1 [shape = 'u32[144,128]{1,0:T(1,128)}', space=vmem, size = 0x12000, scoped, tag = 'internal scratch']
  %s0 = inlined_call_operand.vmem [shape: f32[1,512], index: 0, kind: input, shape index: {}]
  %s1 = inlined_call_operand.vmem [shape: f32[1,512], index: 1, kind: output, shape index: {}]
  %s2 = sld [smem:[#allocation0]]
  $region14: #{squeeze_pallas.1} parent=0
    _
  %s4 = ssub.s32 1, %s2
  %s5 = scalar_select 0, %s4, %s2
  // Predicated region
  $region2: #{squeeze_pallas.1} parent=0 // pred_check
    _
  $region3: #{squeeze_pallas.1} parent=0 // pred_check_branch
    %7 = sbr.rel (0) target = $region5
  $region4: #{squeeze_pallas.1} parent=0 // pred_region
    _
  $region5: #{squeeze_pallas.1} parent=0 // pred_fallthru
    _
  %v8 = vld [vmem:[%s0] sm:$0xf]
  %v9 = vlaneseq
  %vm10 = vcmp.ge.s32.totalorder %v9, 0
  %vm11 = vcmp.lt.s32.totalorder %v9, 512
  %vm12 = vmand %vm10, %vm11
  %13 = vst.msk [vmem:[%s1] sm:$0xf] %vm12, %v8
  // Predicated region
  $region6: #{squeeze_pallas.1} parent=0 // pred_check
    _
  $region7: #{squeeze_pallas.1} parent=0 // pred_check_branch
    %15 = sbr.rel (0) target = $region9
  $region8: #{squeeze_pallas.1} parent=0 // pred_region
    _
  $region9: #{squeeze_pallas.1} parent=0 // pred_fallthru
    _
  // Predicated region
  $region10: #{squeeze_pallas.1} parent=0 // pred_check
    _
  $region11: #{squeeze_pallas.1} parent=0 // pred_check_branch
    %17 = sbr.rel (0) target = $region13
  $region12: #{squeeze_pallas.1} parent=0 // pred_region
    _
  $region13: #{squeeze_pallas.1} parent=0 // pred_fallthru
    _

</llo_original>
